<compile_context>
chip_gen: v6e
topology: v6e:2x2x1
jax: 0.10.0
libtpu: 0.0.40
codegen_flags: <defaults>
</compile_context>

<pallas_src>
import math

import jax
import jax.numpy as jnp
from jax.experimental import pallas as pl
from jax.experimental.pallas import tpu as pltpu

_EPS = float(jnp.finfo(jnp.float32).eps)       # torch clamp_probs eps for f32
_LOG2PI = math.log(2.0 * math.pi)


def _rcp(x):
    """1/x on the EUP (approx) + one Newton step (restores full f32 accuracy)."""
    r = pl.reciprocal(x, approx=True)
    return r * (2.0 - x * r)


def _cat_logprobs(probs):
    """torch Categorical(probs).logits (normalize -> clamp -> log). Reference."""
    p = probs / jnp.sum(probs, axis=-1, keepdims=True)
    p = jnp.clip(p, _EPS, 1.0 - _EPS)
    return jnp.log(p)


def _make_kernel(num_feat, classes, task, B, TB, d_res, d_x, D, K):
    F = num_feat
    starts = []
    off = F
    for v in classes:
        starts.append(off)
        off += v
    is_reg = (task == "regression")

    def kernel(data_ref, out_ref):
        step = pl.program_id(0)

        # Lane validity mask for the (possibly partial) last tile.  Masking is
        # done with selects (jnp.where) so NaN/Inf from padded lanes never leaks.
        lane = jax.lax.broadcasted_iota(jnp.int32, (1, TB), 1)
        valid = (step * TB + lane) < B                      # (1, TB) bool

        def vsum(v):                                        # masked lane sum
            return jnp.sum(jnp.where(valid, v, 0.0), axis=-1, keepdims=True)

        # ---- shared per-row quantities (lane-dense (1, TB)) -------------------
        t = data_ref[D - 1:D, :].astype(jnp.float32)        # (1, TB)
        scale = 1.0 - (1.0 - 0.01) * t * t                  # covariance scale
        log_scale = jnp.log(scale)
        inv_scale = _rcp(scale)

        # ---- a: -mean log N(x_feat; mu, scale * I) -----------------------------
        mu = data_ref[0:F, :].astype(jnp.float32)           # (F, TB)
        xf = data_ref[d_res:d_res + F, :].astype(jnp.float32)
        diff = xf - mu
        maha = jnp.sum(diff * diff, axis=0, keepdims=True) * inv_scale
        logp = -0.5 * (F * _LOG2PI + F * log_scale + maha)  # (1, TB)

        # ---- b: categorical features (Categorical(probs) quirk) ---------------
        ab_lane = logp
        for g, val in enumerate(classes):
            s0 = starts[g]
            grp = data_ref[s0:s0 + val, :].astype(jnp.float32)      # (val, TB)
            grp_sum = jnp.sum(grp, axis=0, keepdims=True)           # (1, TB)
            cls = data_ref[d_res + F + g:d_res + F + g + 1, :].astype(jnp.int32)
            row = jax.lax.broadcasted_iota(jnp.int32, (val, TB), 0)
            p_sel = jnp.sum(jnp.where(row == cls, grp, 0.0),
                            axis=0, keepdims=True)                  # (1, TB)
            p = jnp.clip(p_sel * _rcp(grp_sum), _EPS, 1.0 - _EPS)
            ab_lane = ab_lane + jnp.log(p)

        ab = vsum(ab_lane)                                           # (1, 1)

        # ---- c: target term factors (reproduces torch's (B,B) broadcast) ------
        xt = data_ref[d_res + d_x - 1:d_res + d_x, :].astype(jnp.float32)
        if is_reg:
            loc = data_ref[d_res - 1:d_res, :].astype(jnp.float32)
            dd = xt - loc
            parts = (ab,
                     vsum(dd * dd),                          # sum_j (x_j-loc_j)^2
                     vsum(0.5 * inv_scale * inv_scale),      # sum_i 1/(2 s_i^2)
                     vsum(log_scale))                        # sum_i log s_i
        else:
            pt = data_ref[d_res - 2:d_res, :].astype(jnp.float32)    # (2, TB)
            pt_sum = jnp.sum(pt, axis=0, keepdims=True)
            ptn = jnp.clip(pt * _rcp(pt_sum), _EPS, 1.0 - _EPS)
            lpt = jnp.log(ptn)                                       # (2, TB)
            cls_t = xt.astype(jnp.int32)
            parts = (ab,
                     vsum(lpt[0:1, :]), vsum(lpt[1:2, :]),   # per-class colsums
                     vsum(jnp.where(cls_t == 0, 1.0, 0.0)),  # class counts
                     vsum(jnp.where(cls_t == 1, 1.0, 0.0)))

        # Assemble the K per-tile statistics into one (1, 1, K) output row.
        k_iota = jax.lax.broadcasted_iota(jnp.int32, (1, K), 1)
        stats = jnp.zeros((1, K), jnp.float32)
        for k, v in enumerate(parts):
            stats = stats + jnp.where(k_iota == k, v, 0.0)
        out_ref[...] = stats.reshape(1, 1, K)

    return kernel


def gaussian_multinomial_loss(res, x, t, *, num_feat, classes, task, tb=None):
    """Pallas implementation of GuassianMultinomial.forward(res, x, t)."""
    B, d_res = res.shape
    _, d_x = x.shape
    assert t.shape == (B, 1)
    D = d_res + d_x + 1
    K = 4 if task == "regression" else 5

    # Tile size along the (lane) batch axis: multiple of 128, or == B.
    if tb is None:
        tb = 1024
    if tb >= B:
        tb = B                               # full-extent block: always legal
    else:
        tb = max(128, (tb // 128) * 128)     # lane axis multiple of 128
    ntiles = (B + tb - 1) // tb

    # One merged lane-dense input: rows = [res^T ; x^T ; t^T], cols = batch.
    data = jnp.concatenate(
        [res.astype(jnp.float32).T,
         x.astype(jnp.float32).T,
         t.astype(jnp.float32).T], axis=0)   # (D, B)

    kernel = _make_kernel(num_feat, list(classes), task, B, tb, d_res, d_x, D, K)

    # Tight VMEM budget: double-buffered input tile + small headroom.
    needed = 2 * D * tb * 4 + (1 << 20)
    vmem_limit = int(min(max(needed, 4 << 20), 32 << 20))

    out = pl.pallas_call(
        kernel,
        out_shape=jax.ShapeDtypeStruct((ntiles, 1, K), jnp.float32),
        grid_spec=pltpu.PrefetchScalarGridSpec(
            num_scalar_prefetch=0,
            grid=(ntiles,),
            in_specs=[pl.BlockSpec((D, tb), lambda i: (0, i))],
            out_specs=pl.BlockSpec((1, 1, K), lambda i: (i, 0, 0)),
        ),
        compiler_params=pltpu.CompilerParams(
            dimension_semantics=("parallel",),   # no carried state -> cores split
            vmem_limit_bytes=vmem_limit,
        ),
    )(data)

    # Tiny final combine on the host side of the kernel (plain XLA scalar ops).
    stats = jnp.sum(out[:, 0, :], axis=0)            # (K,)
    a_b = -stats[0] / B
    if task == "regression":
        c = (stats[1] * stats[2] + B * stats[3]
             + (B * B) * 0.5 * _LOG2PI) / (B * B)
    else:
        c = -(stats[1] * stats[3] + stats[2] * stats[4]) / (B * B)
    return a_b + c


# ----------------------------- pure-JAX reference -----------------------------
def reference_loss(res, x, t, *, num_feat, classes, task):
    F = num_feat
    mu = res[:, :F]
    xf = x[:, :F]
    scale = 1.0 - (1.0 - 0.01) * t ** 2                                  # (B,1)
    s = scale[:, 0]
    maha = jnp.sum((xf - mu) ** 2, axis=-1) / s
    logp = -0.5 * (F * _LOG2PI + F * jnp.log(s) + maha)
    a = -jnp.mean(logp)

    b = 0.0
    idx = F
    for i, val in enumerate(classes):
        lp = _cat_logprobs(res[:, idx:idx + val])
        cls = x[:, F + i].astype(jnp.int32)
        sel = jnp.take_along_axis(lp, cls[:, None], axis=1)[:, 0]
        b = b - jnp.mean(sel)
        idx += val

    xt = x[:, -1]
    if task == "regression":
        loc = res[:, -1]
        lp_mat = (-(xt[None, :] - loc[None, :]) ** 2 / (2.0 * s[:, None] ** 2)
                  - jnp.log(s)[:, None] - 0.5 * _LOG2PI)                 # (B,B)
        c = -jnp.mean(lp_mat)
    else:
        lpt = _cat_logprobs(res[:, -2:])
        cls_t = xt.astype(jnp.int32)
        lp_mat = lpt[:, cls_t]                                           # (B,B)
        c = -jnp.mean(lp_mat)
    return a + b + c


if __name__ == "__main__":
    key = jax.random.PRNGKey(0)
    num_feat = 8
    classes = [4, 3]

    ok = True
    # (B, tb): single-tile small case, and a multi-tile case (tb multiple of 128)
    # with a partial (masked) last tile to exercise the masking path.
    for B, tb in ((8, None), (300, 128)):
        for task in ("classification", "regression"):
            d_res = num_feat + sum(classes) + (1 if task == "regression" else 2)
            key, k1, k2, k3, k4, k5 = jax.random.split(key, 6)

            # res entries interpreted as category probs must be positive (torch
            # Categorical positional arg = probs), so sample uniformly in (0.1, 2].
            res = jax.random.uniform(k1, (B, d_res), jnp.float32, 0.1, 2.0)

            x_cont = jax.random.normal(k2, (B, num_feat), jnp.float32)
            x_cat = jnp.stack(
                [jax.random.randint(jax.random.fold_in(k3, i), (B,), 0, v)
                 .astype(jnp.float32) for i, v in enumerate(classes)], axis=1)
            if task == "regression":
                x_tgt = jax.random.normal(k4, (B, 1), jnp.float32)
            else:
                x_tgt = jax.random.randint(k4, (B, 1), 0, 2).astype(jnp.float32)
            x = jnp.concatenate([x_cont, x_cat, x_tgt], axis=1)

            t = jax.random.uniform(k5, (B, 1), jnp.float32, 0.0, 0.95)

            out = gaussian_multinomial_loss(
                res, x, t, num_feat=num_feat, classes=classes, task=task, tb=tb)
            out = jax.block_until_ready(out)
            ref = reference_loss(
                res, x, t, num_feat=num_feat, classes=classes, task=task)
            if not bool(jnp.allclose(out, ref, rtol=1e-4, atol=1e-4)):
                ok = False
                print(f"MISMATCH task={task} B={B} tb={tb}: "
                      f"kernel={float(out)} ref={float(ref)}")

    if ok:
        print("KERNEL_OK")
</pallas_src>

<mosaic_0001>
module attributes {stable_mosaic.version = 11 : i64} {
  func.func @kernel(%arg0: i32, %arg1: memref<29x8xf32, #tpu.memory_space<vmem>>, %arg2: memref<1x1x5xf32, #tpu.memory_space<vmem>>) attributes {dimension_semantics = [#tpu.dimension_semantics<parallel>], iteration_bounds = array<i64: 1>, scalar_prefetch = 0 : i64, scratch_operands = 0 : i64, tpu.core_type = #tpu.core_type<tc>, window_params = [{transform_indices = @transform_0, window_bounds = array<i64: 29, 8>}, {transform_indices = @transform_1, window_bounds = array<i64: 1, 1, 5>}]} {
    %0 = tpu.iota {dimensions = array<i32: 1>} : vector<1x8xi32>
    %c8_i32 = arith.constant 8 : i32
    %1 = arith.muli %arg0, %c8_i32 : i32
    %2 = vector.broadcast %1 : i32 to vector<1x8xi32>
    %3 = arith.addi %2, %0 : vector<1x8xi32>
    %c8_i32_0 = arith.constant 8 : i32
    %4 = vector.broadcast %c8_i32_0 : i32 to vector<1x8xi32>
    %5 = arith.cmpi slt, %3, %4 : vector<1x8xi32>
    %c28 = arith.constant 28 : index
    %c0 = arith.constant 0 : index
    %6 = vector.load %arg1[%c28, %c0] : memref<29x8xf32, #tpu.memory_space<vmem>>, vector<1x8xf32>
    %cst = arith.constant 9.900000e-01 : f32
    %7 = vector.broadcast %cst : f32 to vector<1x8xf32>
    %8 = arith.mulf %7, %6 : vector<1x8xf32>
    %9 = arith.mulf %8, %6 : vector<1x8xf32>
    %cst_1 = arith.constant 1.000000e+00 : f32
    %10 = vector.broadcast %cst_1 : f32 to vector<1x8xf32>
    %11 = arith.subf %10, %9 : vector<1x8xf32>
    %12 = math.log %11 : vector<1x8xf32>
    %13 = tpu.reciprocal %11 {approx = true} : vector<1x8xf32> -> vector<1x8xf32>
    %14 = arith.mulf %11, %13 : vector<1x8xf32>
    %cst_2 = arith.constant 2.000000e+00 : f32
    %15 = vector.broadcast %cst_2 : f32 to vector<1x8xf32>
    %16 = arith.subf %15, %14 : vector<1x8xf32>
    %17 = arith.mulf %13, %16 : vector<1x8xf32>
    %c0_3 = arith.constant 0 : index
    %c0_4 = arith.constant 0 : index
    %18 = vector.load %arg1[%c0_3, %c0_4] : memref<29x8xf32, #tpu.memory_space<vmem>>, vector<8x8xf32>
    %c17 = arith.constant 17 : index
    %c0_5 = arith.constant 0 : index
    %19 = vector.load %arg1[%c17, %c0_5] : memref<29x8xf32, #tpu.memory_space<vmem>>, vector<8x8xf32>
    %20 = arith.subf %19, %18 : vector<8x8xf32>
    %21 = arith.mulf %20, %20 : vector<8x8xf32>
    %cst_6 = arith.constant dense<0.000000e+00> : vector<8xf32>
    %22 = vector.multi_reduction <add>, %21, %cst_6 [0] : vector<8x8xf32> to vector<8xf32>
    %23 = vector.shape_cast %22 : vector<8xf32> to vector<1x8xf32>
    %24 = arith.mulf %23, %17 : vector<1x8xf32>
    %cst_7 = arith.constant 8.000000e+00 : f32
    %25 = vector.broadcast %cst_7 : f32 to vector<1x8xf32>
    %26 = arith.mulf %25, %12 : vector<1x8xf32>
    %cst_8 = arith.constant 14.7030163 : f32
    %27 = vector.broadcast %cst_8 : f32 to vector<1x8xf32>
    %28 = arith.addf %27, %26 : vector<1x8xf32>
    %29 = arith.addf %28, %24 : vector<1x8xf32>
    %cst_9 = arith.constant -5.000000e-01 : f32
    %30 = vector.broadcast %cst_9 : f32 to vector<1x8xf32>
    %31 = arith.mulf %30, %29 : vector<1x8xf32>
    %c8 = arith.constant 8 : index
    %c0_10 = arith.constant 0 : index
    %32 = vector.load %arg1[%c8, %c0_10] : memref<29x8xf32, #tpu.memory_space<vmem>>, vector<4x8xf32>
    %cst_11 = arith.constant dense<0.000000e+00> : vector<8xf32>
    %33 = vector.multi_reduction <add>, %32, %cst_11 [0] : vector<4x8xf32> to vector<8xf32>
    %34 = vector.shape_cast %33 : vector<8xf32> to vector<1x8xf32>
    %c25 = arith.constant 25 : index
    %c0_12 = arith.constant 0 : index
    %35 = vector.load %arg1[%c25, %c0_12] : memref<29x8xf32, #tpu.memory_space<vmem>>, vector<1x8xf32>
    %36 = arith.fptosi %35 : vector<1x8xf32> to vector<1x8xi32>
    %37 = tpu.iota {dimensions = array<i32: 0>} : vector<4x8xi32>
    %38 = vector.broadcast %36 : vector<1x8xi32> to vector<4x8xi32>
    %39 = arith.cmpi eq, %37, %38 : vector<4x8xi32>
    %cst_13 = arith.constant 0.000000e+00 : f32
    %40 = vector.broadcast %cst_13 : f32 to vector<4x8xf32>
    %41 = arith.select %39, %32, %40 : vector<4x8xi1>, vector<4x8xf32>
    %cst_14 = arith.constant dense<0.000000e+00> : vector<8xf32>
    %42 = vector.multi_reduction <add>, %41, %cst_14 [0] : vector<4x8xf32> to vector<8xf32>
    %43 = vector.shape_cast %42 : vector<8xf32> to vector<1x8xf32>
    %44 = tpu.reciprocal %34 {approx = true} : vector<1x8xf32> -> vector<1x8xf32>
    %45 = arith.mulf %34, %44 : vector<1x8xf32>
    %cst_15 = arith.constant 2.000000e+00 : f32
    %46 = vector.broadcast %cst_15 : f32 to vector<1x8xf32>
    %47 = arith.subf %46, %45 : vector<1x8xf32>
    %48 = arith.mulf %44, %47 : vector<1x8xf32>
    %49 = arith.mulf %43, %48 : vector<1x8xf32>
    %cst_16 = arith.constant 1.1920929E-7 : f32
    %cst_17 = arith.constant 0.99999988 : f32
    %50 = vector.broadcast %cst_16 : f32 to vector<1x8xf32>
    %51 = arith.maximumf %50, %49 : vector<1x8xf32>
    %52 = vector.broadcast %cst_17 : f32 to vector<1x8xf32>
    %53 = arith.minimumf %52, %51 : vector<1x8xf32>
    %54 = math.log %53 : vector<1x8xf32>
    %55 = arith.addf %31, %54 : vector<1x8xf32>
    %c12 = arith.constant 12 : index
    %c0_18 = arith.constant 0 : index
    %56 = vector.load %arg1[%c12, %c0_18] : memref<29x8xf32, #tpu.memory_space<vmem>>, vector<3x8xf32>
    %cst_19 = arith.constant dense<0.000000e+00> : vector<8xf32>
    %57 = vector.multi_reduction <add>, %56, %cst_19 [0] : vector<3x8xf32> to vector<8xf32>
    %58 = vector.shape_cast %57 : vector<8xf32> to vector<1x8xf32>
    %c26 = arith.constant 26 : index
    %c0_20 = arith.constant 0 : index
    %59 = vector.load %arg1[%c26, %c0_20] : memref<29x8xf32, #tpu.memory_space<vmem>>, vector<1x8xf32>
    %60 = arith.fptosi %59 : vector<1x8xf32> to vector<1x8xi32>
    %61 = tpu.iota {dimensions = array<i32: 0>} : vector<3x8xi32>
    %62 = vector.broadcast %60 : vector<1x8xi32> to vector<3x8xi32>
    %63 = arith.cmpi eq, %61, %62 : vector<3x8xi32>
    %cst_21 = arith.constant 0.000000e+00 : f32
    %64 = vector.broadcast %cst_21 : f32 to vector<3x8xf32>
    %65 = arith.select %63, %56, %64 : vector<3x8xi1>, vector<3x8xf32>
    %cst_22 = arith.constant dense<0.000000e+00> : vector<8xf32>
    %66 = vector.multi_reduction <add>, %65, %cst_22 [0] : vector<3x8xf32> to vector<8xf32>
    %67 = vector.shape_cast %66 : vector<8xf32> to vector<1x8xf32>
    %68 = tpu.reciprocal %58 {approx = true} : vector<1x8xf32> -> vector<1x8xf32>
    %69 = arith.mulf %58, %68 : vector<1x8xf32>
    %cst_23 = arith.constant 2.000000e+00 : f32
    %70 = vector.broadcast %cst_23 : f32 to vector<1x8xf32>
    %71 = arith.subf %70, %69 : vector<1x8xf32>
    %72 = arith.mulf %68, %71 : vector<1x8xf32>
    %73 = arith.mulf %67, %72 : vector<1x8xf32>
    %cst_24 = arith.constant 1.1920929E-7 : f32
    %cst_25 = arith.constant 0.99999988 : f32
    %74 = vector.broadcast %cst_24 : f32 to vector<1x8xf32>
    %75 = arith.maximumf %74, %73 : vector<1x8xf32>
    %76 = vector.broadcast %cst_25 : f32 to vector<1x8xf32>
    %77 = arith.minimumf %76, %75 : vector<1x8xf32>
    %78 = math.log %77 : vector<1x8xf32>
    %79 = arith.addf %55, %78 : vector<1x8xf32>
    %cst_26 = arith.constant 0.000000e+00 : f32
    %80 = vector.broadcast %cst_26 : f32 to vector<1x8xf32>
    %81 = arith.select %5, %79, %80 : vector<1x8xi1>, vector<1x8xf32>
    %cst_27 = arith.constant dense<0.000000e+00> : vector<1xf32>
    %82 = vector.multi_reduction <add>, %81, %cst_27 [1] : vector<1x8xf32> to vector<1xf32>
    %83 = vector.shape_cast %82 : vector<1xf32> to vector<1x1xf32>
    %c27 = arith.constant 27 : index
    %c0_28 = arith.constant 0 : index
    %84 = vector.load %arg1[%c27, %c0_28] : memref<29x8xf32, #tpu.memory_space<vmem>>, vector<1x8xf32>
    %c15 = arith.constant 15 : index
    %c0_29 = arith.constant 0 : index
    %85 = vector.load %arg1[%c15, %c0_29] : memref<29x8xf32, #tpu.memory_space<vmem>>, vector<2x8xf32>
    %cst_30 = arith.constant dense<0.000000e+00> : vector<8xf32>
    %86 = vector.multi_reduction <add>, %85, %cst_30 [0] : vector<2x8xf32> to vector<8xf32>
    %87 = vector.shape_cast %86 : vector<8xf32> to vector<1x8xf32>
    %88 = tpu.reciprocal %87 {approx = true} : vector<1x8xf32> -> vector<1x8xf32>
    %89 = arith.mulf %87, %88 : vector<1x8xf32>
    %cst_31 = arith.constant 2.000000e+00 : f32
    %90 = vector.broadcast %cst_31 : f32 to vector<1x8xf32>
    %91 = arith.subf %90, %89 : vector<1x8xf32>
    %92 = arith.mulf %88, %91 : vector<1x8xf32>
    %93 = vector.broadcast %92 : vector<1x8xf32> to vector<2x8xf32>
    %94 = arith.mulf %85, %93 : vector<2x8xf32>
    %cst_32 = arith.constant 1.1920929E-7 : f32
    %cst_33 = arith.constant 0.99999988 : f32
    %95 = vector.broadcast %cst_32 : f32 to vector<2x8xf32>
    %96 = arith.maximumf %95, %94 : vector<2x8xf32>
    %97 = vector.broadcast %cst_33 : f32 to vector<2x8xf32>
    %98 = arith.minimumf %97, %96 : vector<2x8xf32>
    %99 = math.log %98 : vector<2x8xf32>
    %100 = arith.fptosi %84 : vector<1x8xf32> to vector<1x8xi32>
    %101 = vector.extract_strided_slice %99 {offsets = [0, 0], sizes = [1, 8], strides = [1, 1]} : vector<2x8xf32> to vector<1x8xf32>
    %cst_34 = arith.constant 0.000000e+00 : f32
    %102 = vector.broadcast %cst_34 : f32 to vector<1x8xf32>
    %103 = arith.select %5, %101, %102 : vector<1x8xi1>, vector<1x8xf32>
    %cst_35 = arith.constant dense<0.000000e+00> : vector<1xf32>
    %104 = vector.multi_reduction <add>, %103, %cst_35 [1] : vector<1x8xf32> to vector<1xf32>
    %105 = vector.shape_cast %104 : vector<1xf32> to vector<1x1xf32>
    %106 = vector.extract_strided_slice %99 {offsets = [1, 0], sizes = [1, 8], strides = [1, 1]} : vector<2x8xf32> to vector<1x8xf32>
    %cst_36 = arith.constant 0.000000e+00 : f32
    %107 = vector.broadcast %cst_36 : f32 to vector<1x8xf32>
    %108 = arith.select %5, %106, %107 : vector<1x8xi1>, vector<1x8xf32>
    %cst_37 = arith.constant dense<0.000000e+00> : vector<1xf32>
    %109 = vector.multi_reduction <add>, %108, %cst_37 [1] : vector<1x8xf32> to vector<1xf32>
    %110 = vector.shape_cast %109 : vector<1xf32> to vector<1x1xf32>
    %c0_i32 = arith.constant 0 : i32
    %111 = vector.broadcast %c0_i32 : i32 to vector<1x8xi32>
    %112 = arith.cmpi eq, %100, %111 : vector<1x8xi32>
    %cst_38 = arith.constant 1.000000e+00 : f32
    %cst_39 = arith.constant 0.000000e+00 : f32
    %113 = vector.broadcast %cst_38 : f32 to vector<1x8xf32>
    %114 = vector.broadcast %cst_39 : f32 to vector<1x8xf32>
    %115 = arith.select %112, %113, %114 : vector<1x8xi1>, vector<1x8xf32>
    %cst_40 = arith.constant 0.000000e+00 : f32
    %116 = vector.broadcast %cst_40 : f32 to vector<1x8xf32>
    %117 = arith.select %5, %115, %116 : vector<1x8xi1>, vector<1x8xf32>
    %cst_41 = arith.constant dense<0.000000e+00> : vector<1xf32>
    %118 = vector.multi_reduction <add>, %117, %cst_41 [1] : vector<1x8xf32> to vector<1xf32>
    %119 = vector.shape_cast %118 : vector<1xf32> to vector<1x1xf32>
    %c1_i32 = arith.constant 1 : i32
    %120 = vector.broadcast %c1_i32 : i32 to vector<1x8xi32>
    %121 = arith.cmpi eq, %100, %120 : vector<1x8xi32>
    %cst_42 = arith.constant 1.000000e+00 : f32
    %cst_43 = arith.constant 0.000000e+00 : f32
    %122 = vector.broadcast %cst_42 : f32 to vector<1x8xf32>
    %123 = vector.broadcast %cst_43 : f32 to vector<1x8xf32>
    %124 = arith.select %121, %122, %123 : vector<1x8xi1>, vector<1x8xf32>
    %cst_44 = arith.constant 0.000000e+00 : f32
    %125 = vector.broadcast %cst_44 : f32 to vector<1x8xf32>
    %126 = arith.select %5, %124, %125 : vector<1x8xi1>, vector<1x8xf32>
    %cst_45 = arith.constant dense<0.000000e+00> : vector<1xf32>
    %127 = vector.multi_reduction <add>, %126, %cst_45 [1] : vector<1x8xf32> to vector<1xf32>
    %128 = vector.shape_cast %127 : vector<1xf32> to vector<1x1xf32>
    %129 = tpu.iota {dimensions = array<i32: 1>} : vector<1x5xi32>
    %cst_46 = arith.constant 0.000000e+00 : f32
    %130 = vector.broadcast %cst_46 : f32 to vector<1x5xf32>
    %c0_i32_47 = arith.constant 0 : i32
    %131 = vector.broadcast %c0_i32_47 : i32 to vector<1x5xi32>
    %132 = arith.cmpi eq, %129, %131 : vector<1x5xi32>
    %cst_48 = arith.constant 0.000000e+00 : f32
    %133 = vector.shape_cast %83 : vector<1x1xf32> to vector<1x1xf32>
    %134 = vector.broadcast %133 : vector<1x1xf32> to vector<1x5xf32>
    %135 = vector.broadcast %cst_48 : f32 to vector<1x5xf32>
    %136 = arith.select %132, %134, %135 : vector<1x5xi1>, vector<1x5xf32>
    %137 = arith.addf %130, %136 : vector<1x5xf32>
    %c1_i32_49 = arith.constant 1 : i32
    %138 = vector.broadcast %c1_i32_49 : i32 to vector<1x5xi32>
    %139 = arith.cmpi eq, %129, %138 : vector<1x5xi32>
    %cst_50 = arith.constant 0.000000e+00 : f32
    %140 = vector.shape_cast %105 : vector<1x1xf32> to vector<1x1xf32>
    %141 = vector.broadcast %140 : vector<1x1xf32> to vector<1x5xf32>
    %142 = vector.broadcast %cst_50 : f32 to vector<1x5xf32>
    %143 = arith.select %139, %141, %142 : vector<1x5xi1>, vector<1x5xf32>
    %144 = arith.addf %137, %143 : vector<1x5xf32>
    %c2_i32 = arith.constant 2 : i32
    %145 = vector.broadcast %c2_i32 : i32 to vector<1x5xi32>
    %146 = arith.cmpi eq, %129, %145 : vector<1x5xi32>
    %cst_51 = arith.constant 0.000000e+00 : f32
    %147 = vector.shape_cast %110 : vector<1x1xf32> to vector<1x1xf32>
    %148 = vector.broadcast %147 : vector<1x1xf32> to vector<1x5xf32>
    %149 = vector.broadcast %cst_51 : f32 to vector<1x5xf32>
    %150 = arith.select %146, %148, %149 : vector<1x5xi1>, vector<1x5xf32>
    %151 = arith.addf %144, %150 : vector<1x5xf32>
    %c3_i32 = arith.constant 3 : i32
    %152 = vector.broadcast %c3_i32 : i32 to vector<1x5xi32>
    %153 = arith.cmpi eq, %129, %152 : vector<1x5xi32>
    %cst_52 = arith.constant 0.000000e+00 : f32
    %154 = vector.shape_cast %119 : vector<1x1xf32> to vector<1x1xf32>
    %155 = vector.broadcast %154 : vector<1x1xf32> to vector<1x5xf32>
    %156 = vector.broadcast %cst_52 : f32 to vector<1x5xf32>
    %157 = arith.select %153, %155, %156 : vector<1x5xi1>, vector<1x5xf32>
    %158 = arith.addf %151, %157 : vector<1x5xf32>
    %c4_i32 = arith.constant 4 : i32
    %159 = vector.broadcast %c4_i32 : i32 to vector<1x5xi32>
    %160 = arith.cmpi eq, %129, %159 : vector<1x5xi32>
    %cst_53 = arith.constant 0.000000e+00 : f32
    %161 = vector.shape_cast %128 : vector<1x1xf32> to vector<1x1xf32>
    %162 = vector.broadcast %161 : vector<1x1xf32> to vector<1x5xf32>
    %163 = vector.broadcast %cst_53 : f32 to vector<1x5xf32>
    %164 = arith.select %160, %162, %163 : vector<1x5xi1>, vector<1x5xf32>
    %165 = arith.addf %158, %164 : vector<1x5xf32>
    %166 = vector.shape_cast %165 : vector<1x5xf32> to vector<1x1x5xf32>
    %c0_54 = arith.constant 0 : index
    %c0_55 = arith.constant 0 : index
    %c0_56 = arith.constant 0 : index
    %167 = vector.load %arg2[%c0_54, %c0_55, %c0_56] : memref<1x1x5xf32, #tpu.memory_space<vmem>>, vector<1x1x5xf32>
    tpu.vector_store %arg2[%c0_54, %c0_55, %c0_56], %166 {strides = array<i32>} : memref<1x1x5xf32, #tpu.memory_space<vmem>>, vector<1x1x5xf32>,
    return
  }
  func.func @transform_0(%arg0: i32) -> (i32, i32) {
    %c0_i32 = arith.constant 0 : i32
    %c0_i32_0 = arith.constant 0 : i32
    return %c0_i32, %arg0 : i32, i32
  }
  func.func @transform_1(%arg0: i32) -> (i32, i32, i32) {
    %c0_i32 = arith.constant 0 : i32
    %c0_i32_0 = arith.constant 0 : i32
    %c0_i32_1 = arith.constant 0 : i32
    return %arg0, %c0_i32, %c0_i32_0 : i32, i32, i32
  }
}

</mosaic_0001>

<llo_original>
// kernel: tpu_custom_call.1
$region0: #{tpu_custom_call.1}
  #allocation0 [shape = 'u32[]', space=smem, size = 0x4, offset = 0x4, fixed_abs, tag = 'smem constant byte address 0x4 - core index']
  #allocation1 [shape = 'u32[144,128]{1,0:T(1,128)}', space=vmem, size = 0x12000, scoped, tag = 'internal scratch']
  %s0 = inlined_call_operand.vmem [shape: f32[29,8], index: 0, kind: input, shape index: {}]
  %s1 = inlined_call_operand.hbm [shape: f32[1,1,5], index: 1, kind: output, shape index: {}]
  %s2 = sld [smem:[#allocation0]]
  $region14: #{tpu_custom_call.1} parent=0
    _
  %s4 = ssub.s32 1, %s2
  %s5 = scalar_select 0, %s4, %s2
  $region1: #{tpu_custom_call.1} parent=0
    #allocation2 [shape = 'u8[512]{0}', space=vmem, size = 0x400, scoped, tag = 'output window, operand 0, single buffered']
    #allocation3 [shape = 's32[1]{0}', space=sflag, size = 0x4, scoped, tag = 'scoped memory for tpu_custom_call.1']
    %6 = vsyncpa [#allocation3], 0
    // Predicated region
    $region2: #{tpu_custom_call.1} parent=1 // pred_check
      _
    $region3: #{tpu_custom_call.1} parent=1 // pred_check_branch
      %8 = sbr.rel (0) target = $region5
    $region4: #{tpu_custom_call.1} parent=1 // pred_region
      _
    $region5: #{tpu_custom_call.1} parent=1 // pred_fallthru
      _
    %v9 = vlaneseq
    %v10 = vand.u32 %v9, 127
    %s11 = smul.u32 0, 8
    %v12 = vstv %s11
    %v13 = vadd.s32 %v12, %v10
    %vm14 = vcmp.lt.s32.totalorder %v13, 8
    %v15 = vld [vmem:[%s0 + $0x1c] sm:$0x1]
    %v16 = vmul.f32 %v15, 0.99
    %v17 = vmul.f32 %v16, %v15
    %v18 = vsub.f32 1.0, %v17
    %v19 = vlog2.pop %v18
    %v20 = vmul.f32 %v19, 0.6931472
    %v21 = vrcp.pop %v18
    %v22 = vmul.f32 %v18, %v21
    %v23 = vsub.f32 2.0, %v22
    %v24 = vmul.f32 %v21, %v23
    %v25 = vld [vmem:[%s0] sm:$0xff]
    %v26 = vld [vmem:[%s0 + $0x11] sm:$0xff]
    %v27 = vsub.f32 %v26, %v25
    %v28 = vmul.f32 %v27, %v27
    %vm29 = vcmask 64512
    %v30 = vsel %vm29, %v28, 0.0
    %v31 = vrot.slane %v30, 4
    %v32 = vadd.f32 %v30, %v31
    %v33 = vrot.slane %v32, 2
    %v34 = vadd.f32 %v32, %v33
    %v35 = vrot.slane %v34, 1
    %v36 = vadd.f32 %v34, %v35
    %v37 = vmul.f32 %v36, %v24
    %v38 = vmul.f32 %v20, 8.0
    %v39 = vadd.f32 %v38, 14.703016
    %v40 = vadd.f32 %v39, %v37
    %v41 = vmul.f32 %v40, -0.5
    %v42 = vld [vmem:[%s0 + $0x8] sm:$0xf]
    %vm43 = vcmask 60416
    %v44 = vsel %vm43, %v42, 0.0
    %v45 = vrot.slane %v44, 4
    %v46 = vadd.f32 %v44, %v45
    %v47 = vrot.slane %v46, 2
    %v48 = vadd.f32 %v46, %v47
    %v49 = vrot.slane %v48, 1
    %v50 = vadd.f32 %v48, %v49
    %v51 = vld [vmem:[%s0 + $0x19] sm:$0x1]
    %v52 = vcvt.f32.s32.to.zero.pseudo %v51
    %v53 = vlaneseq
    %v54 = vshrl.u32 %v53, 7
    %v55 = vlaneseq
    %v56 = vshrl.u32 %v55, 7
    %v57 = vsub.s32 0, %v56
    %v58 = vrot.slane %v52, %v57
    %vm59 = vcmp.eq.s32.totalorder %v54, %v58
    %v60 = vsel %vm59, %v42, 0.0
    %v61 = vsel %vm43, %v60, 0.0
    %v62 = vrot.slane %v61, 4
    %v63 = vadd.f32 %v61, %v62
    %v64 = vrot.slane %v63, 2
    %v65 = vadd.f32 %v63, %v64
    %v66 = vrot.slane %v65, 1
    %v67 = vadd.f32 %v65, %v66
    %v68 = vrcp.pop %v50
    %v69 = vmul.f32 %v50, %v68
    %v70 = vsub.f32 2.0, %v69
    %v71 = vmul.f32 %v68, %v70
    %v72 = vmul.f32 %v67, %v71
    %v73 = vmax.f32 %v72, 1.1920929e-07
    %v74 = vmin.f32 %v73, 0.9999999
    %v75 = vlog2.pop %v74
    %v76 = vmul.f32 %v75, 0.6931472
    %v77 = vadd.f32 %v41, %v76
    %v78 = vld [vmem:[%s0 + $0xc] sm:$0x7]
    %vm79 = vcmask 59392
    %v80 = vsel %vm79, %v78, 0.0
    %v81 = vrot.slane %v80, 4
    %v82 = vadd.f32 %v80, %v81
    %v83 = vrot.slane %v82, 2
    %v84 = vadd.f32 %v82, %v83
    %v85 = vrot.slane %v84, 1
    %v86 = vadd.f32 %v84, %v85
    %v87 = vld [vmem:[%s0 + $0x1a] sm:$0x1]
    %v88 = vcvt.f32.s32.to.zero.pseudo %v87
    %v89 = vlaneseq
    %v90 = vshrl.u32 %v89, 7
    %v91 = vsub.s32 0, %v90
    %v92 = vrot.slane %v88, %v91
    %vm93 = vcmp.eq.s32.totalorder %v54, %v92
    %v94 = vsel %vm93, %v78, 0.0
    %v95 = vsel %vm79, %v94, 0.0
    %v96 = vrot.slane %v95, 4
    %v97 = vadd.f32 %v95, %v96
    %v98 = vrot.slane %v97, 2
    %v99 = vadd.f32 %v97, %v98
    %v100 = vrot.slane %v99, 1
    %v101 = vadd.f32 %v99, %v100
    %v102 = vrcp.pop %v86
    %v103 = vmul.f32 %v86, %v102
    %v104 = vsub.f32 2.0, %v103
    %v105 = vmul.f32 %v102, %v104
    %v106 = vmul.f32 %v101, %v105
    %v107 = vmax.f32 %v106, 1.1920929e-07
    %v108 = vmin.f32 %v107, 0.9999999
    %v109 = vlog2.pop %v108
    %v110 = vmul.f32 %v109, 0.6931472
    %v111 = vadd.f32 %v77, %v110
    %v112 = vsel %vm14, %v111, 0.0
    %vm113 = vcmask 57344
    %v114 = vsel %vm113, %v112, 0.0
    %115 = vadd.xlane.f32.xlu0 %v114
    %v116 = vpop.xlane.xlu0 %115
    %v117 = vld [vmem:[%s0 + $0x1b] sm:$0x1]
    %v118 = vld [vmem:[%s0 + $0xf] sm:$0x3]
    %vm119 = vcmask 58368
    %v120 = vsel %vm119, %v118, 0.0
    %v121 = vrot.slane %v120, 4
    %v122 = vadd.f32 %v120, %v121
    %v123 = vrot.slane %v122, 2
    %v124 = vadd.f32 %v122, %v123
    %v125 = vrot.slane %v124, 1
    %v126 = vadd.f32 %v124, %v125
    %v127 = vrcp.pop %v126
    %v128 = vmul.f32 %v126, %v127
    %v129 = vsub.f32 2.0, %v128
    %v130 = vmul.f32 %v127, %v129
    %v131 = vmul.f32 %v118, %v130
    %v132 = vmax.f32 %v131, 1.1920929e-07
    %v133 = vmin.f32 %v132, 0.9999999
    %v134 = vlog2.pop %v133
    %v135 = vmul.f32 %v134, 0.6931472
    %v136 = vcvt.f32.s32.to.zero.pseudo %v117
    %v137 = vsel %vm14, %v135, 0.0
    %v138 = vsel %vm113, %v137, 0.0
    %139 = vadd.xlane.f32.xlu0 %v138
    %v140 = vpop.xlane.xlu0 %139
    %vm141 = vcmask 58369
    %v142 = vsel %vm141, %v137, 0.0
    %143 = vadd.xlane.f32.xlu0 %v142
    %v144 = vpop.xlane.xlu0 %143
    %vm145 = vcmp.eq.s32.totalorder %v136, 0
    %v146 = vsel %vm145, 1.0, 0.0
    %v147 = vsel %vm14, %v146, 0.0
    %v148 = vsel %vm113, %v147, 0.0
    %149 = vadd.xlane.f32.xlu0 %v148
    %v150 = vpop.xlane.xlu0 %149
    %vm151 = vcmp.eq.s32.totalorder %v136, 1
    %v152 = vsel %vm151, 1.0, 0.0
    %v153 = vsel %vm14, %v152, 0.0
    %v154 = vsel %vm113, %v153, 0.0
    %155 = vadd.xlane.f32.xlu0 %v154
    %v156 = vpop.xlane.xlu0 %155
    %vm157 = vcmp.eq.s32.totalorder %v10, 0
    %v158 = vsel %vm157, %v116, 0.0
    %v159 = vadd.f32 %v158, 0.0
    %vm160 = vcmp.eq.s32.totalorder %v10, 1
    %v161 = vsel %vm160, %v140, 0.0
    %v162 = vadd.f32 %v159, %v161
    %vm163 = vcmp.eq.s32.totalorder %v10, 2
    %v164 = vsel %vm163, %v144, 0.0
    %v166 = vrot.slane %v164, 1
    %v168 = vadd.f32 %v162, %v166
    %vm169 = vcmp.eq.s32.totalorder %v10, 3
    %v170 = vsel %vm169, %v150, 0.0
    %v171 = vadd.f32 %v168, %v170
    %vm172 = vcmp.eq.s32.totalorder %v10, 4
    %v173 = vsel %vm172, %v156, 0.0
    %v174 = vadd.f32 %v171, %v173
    %vm175 = vcmask 32768
    %176 = vst.msk [vmem:[#allocation2] sm:$0x1] %vm175, %v174
    // Predicated region
    $region6: #{tpu_custom_call.1} parent=1 // pred_check
      _
    $region7: #{tpu_custom_call.1} parent=1 // pred_check_branch
      %178 = sbr.rel (0) target = $region9
    $region8: #{tpu_custom_call.1} parent=1 // pred_region
      %s180 = ssub.s32 16, 16
      %181 = vsyncadd [#allocation3], %s180
      %s183 = sshll.u32 [#allocation2], 4
      %s184 = int_to_ptr.vmem [resolvable:$true] %s183
      %186 = dma.vmem_to_hbm [thread:$0]  %s184, 16, %s1, [#allocation3]
    $region9: #{tpu_custom_call.1} parent=1 // pred_fallthru
      _
    // Predicated region
    $region10: #{tpu_custom_call.1} parent=1 // pred_check
      _
    $region11: #{tpu_custom_call.1} parent=1 // pred_check_branch
      %188 = sbr.rel (0) target = $region13
    $region12: #{tpu_custom_call.1} parent=1 // pred_region
      %189 = dma.done [#allocation3], 16
    $region13: #{tpu_custom_call.1} parent=1 // pred_fallthru
      _
    %190 = vsyncpa [#allocation3], 1

</llo_original>
